<compile_context>
chip_gen: v6e
topology: v6e:2x2x1
jax: 0.10.0
libtpu: 0.0.40
codegen_flags: <defaults>
</compile_context>

<pallas_src>
import jax
import jax.numpy as jnp
from jax.experimental import pallas as pl
from jax.experimental.pallas import tpu as pltpu


def _round_up(n, m):
    return ((n + m - 1) // m) * m


def risk_model_kernel(x_ref, w1_ref, b1_ref, w2_ref, b2_ref, o_ref):
    # fc1: (TILE_B, in)bf16 @ (in, hidden)bf16 -> f32 accumulate on the MXU
    h = jnp.dot(x_ref[...], w1_ref[...], preferred_element_type=jnp.float32)
    h = jnp.maximum(h + b1_ref[...], 0.0)              # bias + ReLU in f32 (VPU)
    # fc2: cast activations to bf16 so the MXU stays on its native bf16 path,
    # accumulate in f32, add f32 bias.
    out = jnp.dot(h.astype(w2_ref.dtype), w2_ref[...],
                  preferred_element_type=jnp.float32)
    out = out + b2_ref[...]
    o_ref[...] = out.astype(o_ref.dtype)


def prepare_params(w1, b1, w2, b2, *, stream_dtype=jnp.bfloat16):
    """Convert PyTorch nn.Linear layout -> kernel layout, ONCE.

    w1: (hidden, in), b1: (hidden,), w2: (out, hidden), b2: (out,)
    Weights are stored in `stream_dtype` (bf16) for HBM traffic / MXU;
    biases stay f32 (they are tiny and are added to the f32 accumulator).
    """
    w1_t = jnp.asarray(w1).T.astype(stream_dtype)          # (in, hidden) bf16
    w2_t = jnp.asarray(w2).T.astype(stream_dtype)          # (hidden, out) bf16
    b1_2d = jnp.asarray(b1).astype(jnp.float32).reshape(1, -1)   # (1, hidden) f32
    b2_2d = jnp.asarray(b2).astype(jnp.float32).reshape(1, -1)   # (1, out)    f32
    return w1_t, b1_2d, w2_t, b2_2d


def risk_model_forward(x, params, *, tile_b=8192, vmem_budget_bytes=20 << 20):
    """x: (B, input_dim); params: output of prepare_params (cached by caller)."""
    w1_t, b1_2d, w2_t, b2_2d = params
    B, input_dim = x.shape
    hidden_dim = w1_t.shape[1]
    output_dim = w2_t.shape[1]
    out_dtype = x.dtype
    stream_dtype = w1_t.dtype

    # Pad batch only to a sublane multiple (8); the ragged final grid block is
    # handled by Pallas, so no padding to a multiple of tile_b is needed.
    B_pad = _round_up(B, 8)
    if B_pad != B:
        x = jnp.pad(x, ((0, B_pad - B), (0, 0)))

    # Stream x in bf16 (no-op if already bf16); accumulation stays f32.
    x = x.astype(stream_dtype)

    # Batch tile: big (amortizes per-grid-step overhead), multiple of 8,
    # adaptively shrunk to fit an explicit VMEM budget (portable to v7x/v5e).
    tile_b = max(8, min((tile_b // 8) * 8, B_pad))

    def vmem_estimate(tb):
        x_blk = tb * input_dim * jnp.dtype(stream_dtype).itemsize * 2      # 2-buf
        o_blk = tb * output_dim * jnp.dtype(out_dtype).itemsize * 2        # 2-buf
        h_tmp = tb * hidden_dim * (4 + 2)                                  # f32 + bf16 cast
        o_tmp = tb * output_dim * 4                                        # f32 acc
        wgt = (input_dim * hidden_dim + hidden_dim * output_dim) * 2 \
              + (hidden_dim + output_dim) * 4
        return x_blk + o_blk + h_tmp + o_tmp + wgt

    while tile_b > 8 and vmem_estimate(tile_b) > vmem_budget_bytes:
        tile_b = max(8, (tile_b // 2 // 8) * 8)

    vmem_limit = int(min(max(2 * vmem_estimate(tile_b) + (4 << 20), 32 << 20),
                         48 << 20))

    num_tiles = pl.cdiv(B_pad, tile_b)

    cost = pl.CostEstimate(
        flops=2 * B_pad * (input_dim * hidden_dim + hidden_dim * output_dim),
        transcendentals=0,
        bytes_accessed=(B_pad * input_dim * jnp.dtype(stream_dtype).itemsize
                        + B_pad * output_dim * jnp.dtype(out_dtype).itemsize
                        + (input_dim * hidden_dim + hidden_dim * output_dim) * 2
                        + (hidden_dim + output_dim) * 4),
    )

    out = pl.pallas_call(
        risk_model_kernel,
        out_shape=jax.ShapeDtypeStruct((B_pad, output_dim), out_dtype),
        grid_spec=pl.GridSpec(
            grid=(num_tiles,),
            in_specs=[
                # x: streamed per batch tile (double-buffered by Pallas)
                pl.BlockSpec((tile_b, input_dim), lambda i: (i, 0)),
                # weights/biases: constant index map -> VMEM-resident across steps
                pl.BlockSpec((input_dim, hidden_dim), lambda i: (0, 0)),
                pl.BlockSpec((1, hidden_dim), lambda i: (0, 0)),
                pl.BlockSpec((hidden_dim, output_dim), lambda i: (0, 0)),
                pl.BlockSpec((1, output_dim), lambda i: (0, 0)),
            ],
            out_specs=pl.BlockSpec((tile_b, output_dim), lambda i: (i, 0)),
        ),
        compiler_params=pltpu.CompilerParams(
            # batch tiles are independent -> shard across TensorCores
            dimension_semantics=("parallel",),
            vmem_limit_bytes=vmem_limit),
        cost_estimate=cost,
    )(x, w1_t, b1_2d, w2_t, b2_2d)

    if B_pad != B:
        out = out[:B]          # rows only; no column slice needed anymore
    return out


def init_params(key, input_dim, hidden_dim, output_dim):
    """Deterministic init mimicking nn.Linear's uniform(-1/sqrt(fan_in), ...)."""
    k1, k2, k3, k4 = jax.random.split(key, 4)
    bound1 = 1.0 / jnp.sqrt(input_dim)
    bound2 = 1.0 / jnp.sqrt(hidden_dim)
    w1 = jax.random.uniform(k1, (hidden_dim, input_dim), jnp.float32,
                            -bound1, bound1)
    b1 = jax.random.uniform(k2, (hidden_dim,), jnp.float32, -bound1, bound1)
    w2 = jax.random.uniform(k3, (output_dim, hidden_dim), jnp.float32,
                            -bound2, bound2)
    b2 = jax.random.uniform(k4, (output_dim,), jnp.float32, -bound2, bound2)
    return w1, b1, w2, b2


if __name__ == "__main__":
    input_dim, hidden_dim, output_dim = 16, 32, 8
    batch = 4

    key = jax.random.PRNGKey(0)
    kx, kp = jax.random.split(key)
    x = jax.random.normal(kx, (batch, input_dim), jnp.float32)
    w1, b1, w2, b2 = init_params(kp, input_dim, hidden_dim, output_dim)

    # Layout plumbing / dtype conversion done once, outside the per-call path.
    params = prepare_params(w1, b1, w2, b2)

    out = risk_model_forward(x, params)
    out = jax.block_until_ready(out)

    # Reference check in plain JAX (same math as the PyTorch forward, f32).
    ref = jnp.maximum(x @ w1.T + b1, 0.0) @ w2.T + b2
    assert out.shape == (batch, output_dim)
    # bf16-streamed inputs/weights vs f32 reference -> relaxed tolerance.
    assert jnp.allclose(out, ref, atol=3e-2, rtol=3e-2)

    print("KERNEL_OK")
</pallas_src>

<mosaic_0001>
module attributes {stable_mosaic.version = 11 : i64} {
  func.func @risk_model_kernel(%arg0: i32, %arg1: memref<8x16xbf16, #tpu.memory_space<vmem>>, %arg2: memref<16x32xbf16, #tpu.memory_space<vmem>>, %arg3: memref<1x32xf32, #tpu.memory_space<vmem>>, %arg4: memref<32x8xbf16, #tpu.memory_space<vmem>>, %arg5: memref<1x8xf32, #tpu.memory_space<vmem>>, %arg6: memref<8x8xf32, #tpu.memory_space<vmem>>) attributes {dimension_semantics = [#tpu.dimension_semantics<parallel>], iteration_bounds = array<i64: 1>, scalar_prefetch = 0 : i64, scratch_operands = 0 : i64, tpu.core_type = #tpu.core_type<tc>, window_params = [{transform_indices = @transform_0, window_bounds = array<i64: 8, 16>}, {pipeline_mode = #tpu.pipeline_mode<synchronous>, transform_indices = @transform_1, window_bounds = array<i64: 16, 32>}, {pipeline_mode = #tpu.pipeline_mode<synchronous>, transform_indices = @transform_2, window_bounds = array<i64: 1, 32>}, {pipeline_mode = #tpu.pipeline_mode<synchronous>, transform_indices = @transform_3, window_bounds = array<i64: 32, 8>}, {pipeline_mode = #tpu.pipeline_mode<synchronous>, transform_indices = @transform_4, window_bounds = array<i64: 1, 8>}, {transform_indices = @transform_5, window_bounds = array<i64: 8, 8>}]} {
    %c0 = arith.constant 0 : index
    %c0_0 = arith.constant 0 : index
    %0 = vector.load %arg1[%c0, %c0_0] : memref<8x16xbf16, #tpu.memory_space<vmem>>, vector<8x16xbf16>
    %c0_1 = arith.constant 0 : index
    %c0_2 = arith.constant 0 : index
    %1 = vector.load %arg2[%c0_1, %c0_2] : memref<16x32xbf16, #tpu.memory_space<vmem>>, vector<16x32xbf16>
    %cst = arith.constant dense<0.000000e+00> : vector<8x32xf32>
    %2 = tpu.matmul %0, %1, %cst {dimension_numbers = #tpu.dot_dimension_numbers<[1], [0], [0], [1], [0, 0, 1, 1], [], []>} : vector<8x16xbf16>, vector<16x32xbf16>, vector<8x32xf32> -> vector<8x32xf32>
    %c0_3 = arith.constant 0 : index
    %c0_4 = arith.constant 0 : index
    %3 = vector.load %arg3[%c0_3, %c0_4] : memref<1x32xf32, #tpu.memory_space<vmem>>, vector<1x32xf32>
    %4 = vector.broadcast %3 : vector<1x32xf32> to vector<8x32xf32>
    %5 = arith.addf %2, %4 : vector<8x32xf32>
    %cst_5 = arith.constant 0.000000e+00 : f32
    %6 = vector.broadcast %cst_5 : f32 to vector<8x32xf32>
    %7 = arith.maximumf %5, %6 : vector<8x32xf32>
    %8 = arith.truncf %7 : vector<8x32xf32> to vector<8x32xbf16>
    %c0_6 = arith.constant 0 : index
    %c0_7 = arith.constant 0 : index
    %9 = vector.load %arg4[%c0_6, %c0_7] : memref<32x8xbf16, #tpu.memory_space<vmem>>, vector<32x8xbf16>
    %cst_8 = arith.constant dense<0.000000e+00> : vector<8x8xf32>
    %10 = tpu.matmul %8, %9, %cst_8 {dimension_numbers = #tpu.dot_dimension_numbers<[1], [0], [0], [1], [0, 0, 1, 1], [], []>} : vector<8x32xbf16>, vector<32x8xbf16>, vector<8x8xf32> -> vector<8x8xf32>
    %c0_9 = arith.constant 0 : index
    %c0_10 = arith.constant 0 : index
    %11 = vector.load %arg5[%c0_9, %c0_10] : memref<1x8xf32, #tpu.memory_space<vmem>>, vector<1x8xf32>
    %12 = vector.broadcast %11 : vector<1x8xf32> to vector<8x8xf32>
    %13 = arith.addf %10, %12 : vector<8x8xf32>
    %c0_11 = arith.constant 0 : index
    %c0_12 = arith.constant 0 : index
    %14 = vector.load %arg6[%c0_11, %c0_12] : memref<8x8xf32, #tpu.memory_space<vmem>>, vector<8x8xf32>
    tpu.vector_store %arg6[%c0_11, %c0_12], %13 {strides = array<i32>} : memref<8x8xf32, #tpu.memory_space<vmem>>, vector<8x8xf32>,
    return
  }
  func.func @transform_0(%arg0: i32) -> (i32, i32) {
    %c0_i32 = arith.constant 0 : i32
    %c0_i32_0 = arith.constant 0 : i32
    return %arg0, %c0_i32 : i32, i32
  }
  func.func @transform_1(%arg0: i32) -> (i32, i32) {
    %c0_i32 = arith.constant 0 : i32
    %c0_i32_0 = arith.constant 0 : i32
    %c0_i32_1 = arith.constant 0 : i32
    return %c0_i32, %c0_i32_0 : i32, i32
  }
  func.func @transform_2(%arg0: i32) -> (i32, i32) {
    %c0_i32 = arith.constant 0 : i32
    %c0_i32_0 = arith.constant 0 : i32
    %c0_i32_1 = arith.constant 0 : i32
    return %c0_i32, %c0_i32_0 : i32, i32
  }
  func.func @transform_3(%arg0: i32) -> (i32, i32) {
    %c0_i32 = arith.constant 0 : i32
    %c0_i32_0 = arith.constant 0 : i32
    %c0_i32_1 = arith.constant 0 : i32
    return %c0_i32, %c0_i32_0 : i32, i32
  }
  func.func @transform_4(%arg0: i32) -> (i32, i32) {
    %c0_i32 = arith.constant 0 : i32
    %c0_i32_0 = arith.constant 0 : i32
    %c0_i32_1 = arith.constant 0 : i32
    return %c0_i32, %c0_i32_0 : i32, i32
  }
  func.func @transform_5(%arg0: i32) -> (i32, i32) {
    %c0_i32 = arith.constant 0 : i32
    %c0_i32_0 = arith.constant 0 : i32
    return %arg0, %c0_i32 : i32, i32
  }
}

</mosaic_0001>

<llo_original>
// kernel: tpu_custom_call.1
$region0: #{tpu_custom_call.1}
  #allocation0 [shape = 'u32[]', space=smem, size = 0x4, offset = 0x4, fixed_abs, tag = 'smem constant byte address 0x4 - core index']
  #allocation1 [shape = 'u32[144,128]{1,0:T(1,128)}', space=vmem, size = 0x12000, scoped, tag = 'internal scratch']
  %s0 = inlined_call_operand.vmem [shape: bf16[8,16], index: 0, kind: input, shape index: {}]
  %s1 = inlined_call_operand.vmem [shape: bf16[16,32], index: 1, kind: input, shape index: {}]
  %s2 = inlined_call_operand.vmem [shape: f32[1,32], index: 2, kind: input, shape index: {}]
  %s3 = inlined_call_operand.vmem [shape: bf16[32,8], index: 3, kind: input, shape index: {}]
  %s4 = inlined_call_operand.vmem [shape: f32[1,8], index: 4, kind: input, shape index: {}]
  %s5 = inlined_call_operand.hbm [shape: f32[8,8], index: 5, kind: output, shape index: {}]
  %s6 = sld [smem:[#allocation0]]
  $region30: #{tpu_custom_call.1} parent=0
    _
  %s8 = ssub.s32 1, %s6
  %s9 = scalar_select 0, %s8, %s6
  $region1: #{tpu_custom_call.1} parent=0
    #allocation2 [shape = 'u8[4096]{0}', space=vmem, size = 0x1000, scoped, tag = 'output window, operand 0, single buffered']
    #allocation3 [shape = 's32[1]{0}', space=sflag, size = 0x4, scoped, tag = 'scoped memory for tpu_custom_call.1']
    %10 = vsyncpa [#allocation3], 0
    // Predicated region
    $region2: #{tpu_custom_call.1} parent=1 // pred_check
      _
    $region3: #{tpu_custom_call.1} parent=1 // pred_check_branch
      %12 = sbr.rel (0) target = $region5
    $region4: #{tpu_custom_call.1} parent=1 // pred_region
      _
    $region5: #{tpu_custom_call.1} parent=1 // pred_fallthru
      _
    // Predicated region
    $region6: #{tpu_custom_call.1} parent=1 // pred_check
      _
    $region7: #{tpu_custom_call.1} parent=1 // pred_check_branch
      %14 = sbr.rel (0) target = $region9
    $region8: #{tpu_custom_call.1} parent=1 // pred_region
      _
    $region9: #{tpu_custom_call.1} parent=1 // pred_fallthru
      _
    // Predicated region
    $region10: #{tpu_custom_call.1} parent=1 // pred_check
      _
    $region11: #{tpu_custom_call.1} parent=1 // pred_check_branch
      %16 = sbr.rel (0) target = $region13
    $region12: #{tpu_custom_call.1} parent=1 // pred_region
      _
    $region13: #{tpu_custom_call.1} parent=1 // pred_fallthru
      _
    // Predicated region
    $region14: #{tpu_custom_call.1} parent=1 // pred_check
      _
    $region15: #{tpu_custom_call.1} parent=1 // pred_check_branch
      %18 = sbr.rel (0) target = $region17
    $region16: #{tpu_custom_call.1} parent=1 // pred_region
      _
    $region17: #{tpu_custom_call.1} parent=1 // pred_fallthru
      _
    // Predicated region
    $region18: #{tpu_custom_call.1} parent=1 // pred_check
      _
    $region19: #{tpu_custom_call.1} parent=1 // pred_check_branch
      %20 = sbr.rel (0) target = $region21
    $region20: #{tpu_custom_call.1} parent=1 // pred_region
      _
    $region21: #{tpu_custom_call.1} parent=1 // pred_fallthru
      _
    %v22 = vld [vmem:[%s0] sm:$0xf]
    %v23 = vld [vmem:[%s1] sm:$0xf]
    %v24 = vld [vmem:[%s1 + $0x4] sm:$0xf]
    %v25 = vld [vmem:[%s2] sm:$0x1]
    %v27 = vlaneseq
    %v28 = vshrl.u32 %v27, 7
    %v29 = vsub.s32 0, %v28
    %v30 = vrot.slane %v25, %v29
    %v34 = vunpack.c.l.b16 %v23
    %v35 = vunpack.c.l.b16 %v24
    %v36 = vpack.c.b16 %v35, %v34
    %vm38 = vcmask 130048
    %v40 = vsel %vm38, %v22, 0
    %42 = vmatprep.subr.bf16.mxu0 0
    %43 = vmatpush1.bf16.msra.mxu0 0
    %44 = vmatprep.subr.bf16.mxu0 0
    %45 = vmatpush1.bf16.msra.mxu0 0
    %46 = vmatprep.subr.bf16.mxu0 0
    %47 = vmatpush1.bf16.msra.mxu0 0
    %48 = vmatprep.subr.bf16.mxu0 0
    %49 = vmatpush1.bf16.msra.mxu0 0
    %50 = vmatprep.subr.bf16.mxu0 0
    %51 = vmatpush1.bf16.msra.mxu0 0
    %52 = vmatprep.subr.bf16.mxu0 0
    %53 = vmatpush1.bf16.msra.mxu0 0
    %54 = vmatprep.subr.bf16.mxu0 0
    %55 = vmatpush1.bf16.msra.mxu0 0
    %56 = vmatprep.subr.bf16.mxu0 0
    %57 = vmatpush1.bf16.msra.mxu0 %v36
    %58 = vmatprep.subr.bf16.mxu0 0
    %59 = vmatpush2.bf16.msra.mxu0 0
    %60 = vmatprep.subr.bf16.mxu0 0
    %61 = vmatpush2.bf16.msra.mxu0 0
    %62 = vmatprep.subr.bf16.mxu0 0
    %63 = vmatpush2.bf16.msra.mxu0 0
    %64 = vmatprep.subr.bf16.mxu0 0
    %65 = vmatpush2.bf16.msra.mxu0 0
    %66 = vmatprep.subr.bf16.mxu0 0
    %67 = vmatpush2.bf16.msra.mxu0 0
    %68 = vmatprep.subr.bf16.mxu0 0
    %69 = vmatpush2.bf16.msra.mxu0 0
    %70 = vmatprep.subr.bf16.mxu0 0
    %71 = vmatpush2.bf16.msra.mxu0 0
    %72 = vmatprep.subr.bf16.mxu0 0
    %73 = vmatpush2.bf16.msra.mxu0 0
    %74 = vmatprep.mubr.bf16.mxu0 0
    %75 = vmatmul.mubr.bf16.gmra.mxu0 %v40
    %v76 = vpop.f32.mrf.mxu0
    %v77 = vadd.f32 %v30, %v76
    %v78 = vpop.f32.mrf.mxu0
    %v79 = vpop.f32.mrf.mxu0
    %v80 = vpop.f32.mrf.mxu0
    %81 = vdwg.mxu0
    %v82 = vmax.f32 %v77, 0.0
    %v83 = vpack.c.bf16 %v82, %v82
    %v84 = vld [vmem:[%s3] sm:$0xf]
    %v85 = vld [vmem:[%s3 + $0x4] sm:$0xf]
    %v86 = vld [vmem:[%s3 + $0x8] sm:$0xf]
    %v87 = vld [vmem:[%s3 + $0xc] sm:$0xf]
    %v88 = vld [vmem:[%s4] sm:$0x1]
    %v90 = vlaneseq
    %v91 = vshrl.u32 %v90, 7
    %v92 = vsub.s32 0, %v91
    %v93 = vrot.slane %v88, %v92
    %v99 = vunpack.c.l.b16 %v84
    %v100 = vunpack.c.l.b16 %v85
    %v101 = vunpack.c.l.b16 %v86
    %v102 = vunpack.c.l.b16 %v87
    %v103 = vpack.c.b16 %v100, %v99
    %v104 = vpack.c.b16 %v102, %v101
    %vm107 = vcmask 261120
    %v109 = vsel %vm107, %v83, 0
    %111 = vmatprep.subr.bf16.mxu0 0
    %112 = vmatpush1.bf16.msra.mxu0 0
    %113 = vmatprep.subr.bf16.mxu0 0
    %114 = vmatpush1.bf16.msra.mxu0 0
    %115 = vmatprep.subr.bf16.mxu0 0
    %116 = vmatpush1.bf16.msra.mxu0 0
    %117 = vmatprep.subr.bf16.mxu0 0
    %118 = vmatpush1.bf16.msra.mxu0 0
    %119 = vmatprep.subr.bf16.mxu0 0
    %120 = vmatpush1.bf16.msra.mxu0 0
    %121 = vmatprep.subr.bf16.mxu0 0
    %122 = vmatpush1.bf16.msra.mxu0 0
    %123 = vmatprep.subr.bf16.mxu0 0
    %124 = vmatpush1.bf16.msra.mxu0 %v104
    %125 = vmatprep.subr.bf16.mxu0 0
    %126 = vmatpush1.bf16.msra.mxu0 %v103
    %127 = vmatprep.subr.bf16.mxu0 0
    %128 = vmatpush2.bf16.msra.mxu0 0
    %129 = vmatprep.subr.bf16.mxu0 0
    %130 = vmatpush2.bf16.msra.mxu0 0
    %131 = vmatprep.subr.bf16.mxu0 0
    %132 = vmatpush2.bf16.msra.mxu0 0
    %133 = vmatprep.subr.bf16.mxu0 0
    %134 = vmatpush2.bf16.msra.mxu0 0
    %135 = vmatprep.subr.bf16.mxu0 0
    %136 = vmatpush2.bf16.msra.mxu0 0
    %137 = vmatprep.subr.bf16.mxu0 0
    %138 = vmatpush2.bf16.msra.mxu0 0
    %139 = vmatprep.subr.bf16.mxu0 0
    %140 = vmatpush2.bf16.msra.mxu0 0
    %141 = vmatprep.subr.bf16.mxu0 0
    %142 = vmatpush2.bf16.msra.mxu0 0
    %143 = vmatprep.mubr.bf16.mxu0 0
    %144 = vmatmul.mubr.bf16.gmra.mxu0 %v109
    %v145 = vpop.f32.mrf.mxu0
    %v146 = vadd.f32 %v93, %v145
    %v147 = vpop.f32.mrf.mxu0
    %v148 = vpop.f32.mrf.mxu0
    %v149 = vpop.f32.mrf.mxu0
    %150 = vdwg.mxu0
    %vm151 = vcmask 64512
    %152 = vst.msk [vmem:[#allocation2] sm:$0xff] %vm151, %v146
    // Predicated region
    $region22: #{tpu_custom_call.1} parent=1 // pred_check
      _
    $region23: #{tpu_custom_call.1} parent=1 // pred_check_branch
      %154 = sbr.rel (0) target = $region25
    $region24: #{tpu_custom_call.1} parent=1 // pred_region
      %s156 = ssub.s32 128, 128
      %157 = vsyncadd [#allocation3], %s156
      %s159 = sshll.u32 [#allocation2], 4
      %s160 = int_to_ptr.vmem [resolvable:$true] %s159
      %162 = dma.vmem_to_hbm [thread:$0]  %s160, 128, %s5, [#allocation3]
    $region25: #{tpu_custom_call.1} parent=1 // pred_fallthru
      _
    // Predicated region
    $region26: #{tpu_custom_call.1} parent=1 // pred_check
      _
    $region27: #{tpu_custom_call.1} parent=1 // pred_check_branch
      %164 = sbr.rel (0) target = $region29
    $region28: #{tpu_custom_call.1} parent=1 // pred_region
      %165 = dma.done [#allocation3], 128
    $region29: #{tpu_custom_call.1} parent=1 // pred_fallthru
      _
    %166 = vsyncpa [#allocation3], 1

</llo_original>
